<compile_context>
chip_gen: v5e
topology: v5e:2x2
jax: 0.10.0
libtpu: 0.0.40
codegen_flags: <defaults>
</compile_context>

<pallas_src>
import jax
import jax.numpy as jnp
from jax import lax
from jax.experimental import pallas as pl
from jax.experimental.pallas import tpu as pltpu

LN_EPS = 1e-5  # torch.nn.LayerNorm default eps


def _cdiv(a, b):
    return (a + b - 1) // b


def _round_up(a, b):
    return _cdiv(a, b) * b


def _block_diag(block, p):
    """Block-diagonal matrix with `p` copies of `block` (host-side, tiny)."""
    r, c = block.shape
    out = jnp.zeros((p * r, p * c), block.dtype)
    for g in range(p):
        out = out.at[g * r:(g + 1) * r, g * c:(g + 1) * c].set(block)
    return out


def hybrid_embed_kernel(cont_ref, ids_ref, wc_ref, we_ref, b_ref, m_ref,
                        lnw_ref, lnb_ref, out_ref):
    """One packed row-tile of the hybrid embedding.

    cont_ref: [TMP, P*Dc]          packed continuous features
    ids_ref:  [TMP, P]      int32  packed categorical indices
    wc_ref:   [P*Dc, P*Dm]         block-diag continuous projection (W^T padded)
    we_ref:   [P*n_bins, P*Dm]     block-diag embedding table (padded)
    b_ref:    [1, P*Dm]            tiled bias (zeros on categorical lanes)
    m_ref:    [P*Dm, P*Dm]         block-diag averaging matrix (1/d_model)
    lnw_ref:  [1, P*Dm]            tiled LayerNorm weight
    lnb_ref:  [1, P*Dm]            tiled LayerNorm bias
    out_ref:  [TMP, P*Dm]          packed output (lane-dense)
    """
    rows = cont_ref.shape[0]
    p = ids_ref.shape[1]
    nb_total = we_ref.shape[0]
    n_bins = nb_total // p

    # 1) continuous projection (block-diagonal over the P packed logical rows)
    x = jnp.dot(cont_ref[...], wc_ref[...], preferred_element_type=jnp.float32)

    # 2) categorical embedding lookup as a one-hot matmul (gather-free on TPU)
    iota = lax.broadcasted_iota(jnp.int32, (rows, nb_total), 1)
    onehot = jnp.zeros((rows, nb_total), jnp.float32)
    for g in range(p):                        # static unroll, p <= 4
        tgt = ids_ref[:, g:g + 1] + g * n_bins
        onehot = onehot + (iota == tgt).astype(jnp.float32)
    x = x + jnp.dot(onehot, we_ref[...], preferred_element_type=jnp.float32)
    x = x + b_ref[...]

    # 3) dropout is identity in eval mode (no-op)
    # 4) per-logical-row LayerNorm via block-diagonal averaging matmuls
    mean = jnp.dot(x, m_ref[...], preferred_element_type=jnp.float32)
    cent = x - mean
    var = jnp.dot(cent * cent, m_ref[...], preferred_element_type=jnp.float32)
    y = cent * lax.rsqrt(var + LN_EPS)
    out_ref[...] = y * lnw_ref[...] + lnb_ref[...]


def hybrid_input_embedding(continuous, categorical, params):
    """continuous: [B,S,Dc] f32, categorical: [B,S,1] int32 -> [B,S,d_model]."""
    B, S, Dc = continuous.shape
    n_cat = categorical.shape[-1]
    assert n_cat == 1, "forward's .squeeze(-1) path requires n_categorical == 1"
    N = B * S

    w = params["w"].astype(jnp.float32)         # (Dcp, Dc)
    b = params["b"].astype(jnp.float32)         # (Dcp,)
    emb = params["emb"].astype(jnp.float32)     # (n_bins, Dcat)
    ln_w = params["ln_w"].astype(jnp.float32)   # (d_model,)
    ln_b = params["ln_b"].astype(jnp.float32)   # (d_model,)
    Dcp = w.shape[0]
    n_bins, Dcat = emb.shape
    d_model = ln_w.shape[0]
    assert Dcp + Dcat == d_model

    # Lane-packing factor: pack P logical rows per 128-lane output row.
    P = 128 // d_model if (d_model <= 128 and 128 % d_model == 0) else 1

    # Fused block-diagonal weights (projection | embedding) and tiled vectors.
    wt_pad = jnp.zeros((Dc, d_model), jnp.float32).at[:, :Dcp].set(w.T)
    emb_pad = jnp.zeros((n_bins, d_model), jnp.float32).at[:, Dcp:].set(emb)
    wc_big = _block_diag(wt_pad, P)                                   # (P*Dc, P*Dm)
    we_big = _block_diag(emb_pad, P)                                  # (P*nb, P*Dm)
    m_mean = _block_diag(
        jnp.full((d_model, d_model), 1.0 / d_model, jnp.float32), P)  # (P*Dm, P*Dm)
    b_big = jnp.tile(jnp.concatenate([b, jnp.zeros((Dcat,), jnp.float32)]), P)[None, :]
    lnw_big = jnp.tile(ln_w, P)[None, :]
    lnb_big = jnp.tile(ln_b, P)[None, :]

    # Flatten rows; clamp ids (matches JAX-gather semantics for bad inputs).
    cont2d = continuous.reshape(N, Dc).astype(jnp.float32)
    ids2d = jnp.clip(categorical.reshape(N, n_cat)[:, :1].astype(jnp.int32),
                     0, n_bins - 1)

    # Packed-row tiling: big tiles (up to 512 packed = 2048 logical rows) so the
    # kernel is not grid-step-overhead bound; keep >= 2 grid steps when possible
    # so both v7x TensorCores get work. Per-tile VMEM stays < ~1 MiB everywhere.
    rows = _cdiv(N, P)
    TMP = min(512, max(8, _round_up(_cdiv(rows, 2), 8)))
    rows_pad = _round_up(rows, TMP)
    N_pad = rows_pad * P
    grid = (rows_pad // TMP,)

    cont_p = (jnp.zeros((N_pad, Dc), jnp.float32).at[:N].set(cont2d)
              .reshape(rows_pad, P * Dc))
    ids_p = (jnp.zeros((N_pad, 1), jnp.int32).at[:N].set(ids2d)
             .reshape(rows_pad, P))

    out = pl.pallas_call(
        hybrid_embed_kernel,
        out_shape=jax.ShapeDtypeStruct((rows_pad, P * d_model), jnp.float32),
        grid=grid,
        in_specs=[
            pl.BlockSpec((TMP, P * Dc), lambda i: (i, 0)),
            pl.BlockSpec((TMP, P), lambda i: (i, 0)),
            pl.BlockSpec(wc_big.shape, lambda i: (0, 0)),
            pl.BlockSpec(we_big.shape, lambda i: (0, 0)),
            pl.BlockSpec(b_big.shape, lambda i: (0, 0)),
            pl.BlockSpec(m_mean.shape, lambda i: (0, 0)),
            pl.BlockSpec(lnw_big.shape, lambda i: (0, 0)),
            pl.BlockSpec(lnb_big.shape, lambda i: (0, 0)),
        ],
        out_specs=pl.BlockSpec((TMP, P * d_model), lambda i: (i, 0)),
        compiler_params=pltpu.CompilerParams(
            dimension_semantics=("parallel",)),
    )(cont_p, ids_p, wc_big, we_big, b_big, m_mean, lnw_big, lnb_big)

    # Unpack lanes back to logical rows, drop padding, restore (B, S, d_model).
    return out.reshape(N_pad, d_model)[:N].reshape(B, S, d_model)


def reference(continuous, categorical, params):
    """Pure-JAX reference matching the PyTorch forward (eval mode)."""
    xc = continuous @ params["w"].T + params["b"]
    ids = categorical[..., 0]
    xcat = params["emb"][ids]
    x = jnp.concatenate([xc, xcat], axis=-1)
    mean = x.mean(-1, keepdims=True)
    var = ((x - mean) ** 2).mean(-1, keepdims=True)
    y = (x - mean) / jnp.sqrt(var + LN_EPS)
    return y * params["ln_w"] + params["ln_b"]


if __name__ == "__main__":
    # Module config (small): matches HybridInputEmbedding.__init__ math
    d_continuous = 4
    n_categorical = 1          # forward's .squeeze(-1) requires n_categorical == 1
    n_bins = 10
    d_model = 32
    B, S = 2, 8

    # __init__ dimension math
    max_categorical_space = d_model // 4
    cat_embed_dim = max(4, min(d_model // 4, max_categorical_space // n_categorical))  # 8
    d_categorical_proj = n_categorical * cat_embed_dim                                  # 8
    d_continuous_proj = d_model - d_categorical_proj                                    # 24
    assert d_continuous_proj + d_categorical_proj == d_model

    key = jax.random.PRNGKey(0)
    k_w, k_b, k_emb, k_lnw, k_lnb, k_x, k_c = jax.random.split(key, 7)

    # Deterministic synthetic parameters (shapes per nn.Linear / nn.Embedding / nn.LayerNorm)
    params = {
        "w": jax.random.normal(k_w, (d_continuous_proj, d_continuous), jnp.float32) * 0.1,
        "b": jax.random.normal(k_b, (d_continuous_proj,), jnp.float32) * 0.1,
        "emb": jax.random.normal(k_emb, (n_bins, cat_embed_dim), jnp.float32),
        "ln_w": 1.0 + 0.05 * jax.random.normal(k_lnw, (d_model,), jnp.float32),
        "ln_b": 0.05 * jax.random.normal(k_lnb, (d_model,), jnp.float32),
    }

    continuous = jax.random.normal(k_x, (B, S, d_continuous), jnp.float32)
    categorical = jax.random.randint(k_c, (B, S, n_categorical), 0, n_bins, jnp.int32)

    out = hybrid_input_embedding(continuous, categorical, params)
    out = jax.block_until_ready(out)

    ref = reference(continuous, categorical, params)
    assert out.shape == (B, S, d_model)
    assert jnp.allclose(out, ref, atol=1e-4, rtol=1e-4), (
        f"max abs err {jnp.max(jnp.abs(out - ref))}")

    # TODO(synk): dropout is modeled as identity (eval mode); training-mode dropout
    # would need pltpu.prng_* inside the kernel.
    print("KERNEL_OK")
</pallas_src>

<mosaic_0001>
module attributes {stable_mosaic.version = 11 : i64} {
  func.func @hybrid_embed_kernel(%arg0: i32, %arg1: memref<8x16xf32, #tpu.memory_space<vmem>>, %arg2: memref<8x4xi32, #tpu.memory_space<vmem>>, %arg3: memref<16x128xf32, #tpu.memory_space<vmem>>, %arg4: memref<40x128xf32, #tpu.memory_space<vmem>>, %arg5: memref<1x128xf32, #tpu.memory_space<vmem>>, %arg6: memref<128x128xf32, #tpu.memory_space<vmem>>, %arg7: memref<1x128xf32, #tpu.memory_space<vmem>>, %arg8: memref<1x128xf32, #tpu.memory_space<vmem>>, %arg9: memref<8x128xf32, #tpu.memory_space<vmem>>) attributes {dimension_semantics = [#tpu.dimension_semantics<parallel>], iteration_bounds = array<i64: 1>, scalar_prefetch = 0 : i64, scratch_operands = 0 : i64, tpu.core_type = #tpu.core_type<tc>, window_params = [{transform_indices = @transform_0, window_bounds = array<i64: 8, 16>}, {transform_indices = @transform_1, window_bounds = array<i64: 8, 4>}, {pipeline_mode = #tpu.pipeline_mode<synchronous>, transform_indices = @transform_2, window_bounds = array<i64: 16, 128>}, {pipeline_mode = #tpu.pipeline_mode<synchronous>, transform_indices = @transform_3, window_bounds = array<i64: 40, 128>}, {pipeline_mode = #tpu.pipeline_mode<synchronous>, transform_indices = @transform_4, window_bounds = array<i64: 1, 128>}, {pipeline_mode = #tpu.pipeline_mode<synchronous>, transform_indices = @transform_5, window_bounds = array<i64: 128, 128>}, {pipeline_mode = #tpu.pipeline_mode<synchronous>, transform_indices = @transform_6, window_bounds = array<i64: 1, 128>}, {pipeline_mode = #tpu.pipeline_mode<synchronous>, transform_indices = @transform_7, window_bounds = array<i64: 1, 128>}, {transform_indices = @transform_8, window_bounds = array<i64: 8, 128>}]} {
    %c0 = arith.constant 0 : index
    %c0_0 = arith.constant 0 : index
    %0 = vector.load %arg1[%c0, %c0_0] : memref<8x16xf32, #tpu.memory_space<vmem>>, vector<8x16xf32>
    %c0_1 = arith.constant 0 : index
    %c0_2 = arith.constant 0 : index
    %1 = vector.load %arg3[%c0_1, %c0_2] : memref<16x128xf32, #tpu.memory_space<vmem>>, vector<16x128xf32>
    %cst = arith.constant dense<0.000000e+00> : vector<8x128xf32>
    %2 = tpu.matmul %0, %1, %cst {dimension_numbers = #tpu.dot_dimension_numbers<[1], [0], [0], [1], [0, 0, 1, 1], [], []>} : vector<8x16xf32>, vector<16x128xf32>, vector<8x128xf32> -> vector<8x128xf32>
    %3 = tpu.iota {dimensions = array<i32: 1>} : vector<8x40xi32>
    %cst_3 = arith.constant 0.000000e+00 : f32
    %4 = vector.broadcast %cst_3 : f32 to vector<8x40xf32>
    %c0_4 = arith.constant 0 : index
    %c0_5 = arith.constant 0 : index
    %5 = vector.load %arg2[%c0_4, %c0_5] : memref<8x4xi32, #tpu.memory_space<vmem>>, vector<8x1xi32>
    %c0_i32 = arith.constant 0 : i32
    %6 = vector.broadcast %c0_i32 : i32 to vector<8x1xi32>
    %7 = arith.addi %5, %6 : vector<8x1xi32>
    %8 = vector.broadcast %7 : vector<8x1xi32> to vector<8x40xi32>
    %9 = arith.cmpi eq, %3, %8 : vector<8x40xi32>
    %10 = arith.extui %9 : vector<8x40xi1> to vector<8x40xi32>
    %11 = arith.sitofp %10 : vector<8x40xi32> to vector<8x40xf32>
    %12 = arith.addf %4, %11 : vector<8x40xf32>
    %c0_6 = arith.constant 0 : index
    %c1 = arith.constant 1 : index
    %13 = vector.load %arg2[%c0_6, %c1] : memref<8x4xi32, #tpu.memory_space<vmem>>, vector<8x1xi32>
    %c10_i32 = arith.constant 10 : i32
    %14 = vector.broadcast %c10_i32 : i32 to vector<8x1xi32>
    %15 = arith.addi %13, %14 : vector<8x1xi32>
    %16 = vector.broadcast %15 : vector<8x1xi32> to vector<8x40xi32>
    %17 = arith.cmpi eq, %3, %16 : vector<8x40xi32>
    %18 = arith.extui %17 : vector<8x40xi1> to vector<8x40xi32>
    %19 = arith.sitofp %18 : vector<8x40xi32> to vector<8x40xf32>
    %20 = arith.addf %12, %19 : vector<8x40xf32>
    %c0_7 = arith.constant 0 : index
    %c2 = arith.constant 2 : index
    %21 = vector.load %arg2[%c0_7, %c2] : memref<8x4xi32, #tpu.memory_space<vmem>>, vector<8x1xi32>
    %c20_i32 = arith.constant 20 : i32
    %22 = vector.broadcast %c20_i32 : i32 to vector<8x1xi32>
    %23 = arith.addi %21, %22 : vector<8x1xi32>
    %24 = vector.broadcast %23 : vector<8x1xi32> to vector<8x40xi32>
    %25 = arith.cmpi eq, %3, %24 : vector<8x40xi32>
    %26 = arith.extui %25 : vector<8x40xi1> to vector<8x40xi32>
    %27 = arith.sitofp %26 : vector<8x40xi32> to vector<8x40xf32>
    %28 = arith.addf %20, %27 : vector<8x40xf32>
    %c0_8 = arith.constant 0 : index
    %c3 = arith.constant 3 : index
    %29 = vector.load %arg2[%c0_8, %c3] : memref<8x4xi32, #tpu.memory_space<vmem>>, vector<8x1xi32>
    %c30_i32 = arith.constant 30 : i32
    %30 = vector.broadcast %c30_i32 : i32 to vector<8x1xi32>
    %31 = arith.addi %29, %30 : vector<8x1xi32>
    %32 = vector.broadcast %31 : vector<8x1xi32> to vector<8x40xi32>
    %33 = arith.cmpi eq, %3, %32 : vector<8x40xi32>
    %34 = arith.extui %33 : vector<8x40xi1> to vector<8x40xi32>
    %35 = arith.sitofp %34 : vector<8x40xi32> to vector<8x40xf32>
    %36 = arith.addf %28, %35 : vector<8x40xf32>
    %c0_9 = arith.constant 0 : index
    %c0_10 = arith.constant 0 : index
    %37 = vector.load %arg4[%c0_9, %c0_10] : memref<40x128xf32, #tpu.memory_space<vmem>>, vector<40x128xf32>
    %cst_11 = arith.constant dense<0.000000e+00> : vector<8x128xf32>
    %38 = tpu.matmul %36, %37, %cst_11 {dimension_numbers = #tpu.dot_dimension_numbers<[1], [0], [0], [1], [0, 0, 1, 1], [], []>} : vector<8x40xf32>, vector<40x128xf32>, vector<8x128xf32> -> vector<8x128xf32>
    %39 = arith.addf %2, %38 : vector<8x128xf32>
    %c0_12 = arith.constant 0 : index
    %c0_13 = arith.constant 0 : index
    %40 = vector.load %arg5[%c0_12, %c0_13] : memref<1x128xf32, #tpu.memory_space<vmem>>, vector<1x128xf32>
    %41 = vector.broadcast %40 : vector<1x128xf32> to vector<8x128xf32>
    %42 = arith.addf %39, %41 : vector<8x128xf32>
    %c0_14 = arith.constant 0 : index
    %c0_15 = arith.constant 0 : index
    %43 = vector.load %arg6[%c0_14, %c0_15] : memref<128x128xf32, #tpu.memory_space<vmem>>, vector<128x128xf32>
    %cst_16 = arith.constant dense<0.000000e+00> : vector<8x128xf32>
    %44 = tpu.matmul %42, %43, %cst_16 {dimension_numbers = #tpu.dot_dimension_numbers<[1], [0], [0], [1], [0, 0, 1, 1], [], []>} : vector<8x128xf32>, vector<128x128xf32>, vector<8x128xf32> -> vector<8x128xf32>
    %45 = arith.subf %42, %44 : vector<8x128xf32>
    %46 = arith.mulf %45, %45 : vector<8x128xf32>
    %c0_17 = arith.constant 0 : index
    %c0_18 = arith.constant 0 : index
    %47 = vector.load %arg6[%c0_17, %c0_18] : memref<128x128xf32, #tpu.memory_space<vmem>>, vector<128x128xf32>
    %cst_19 = arith.constant dense<0.000000e+00> : vector<8x128xf32>
    %48 = tpu.matmul %46, %47, %cst_19 {dimension_numbers = #tpu.dot_dimension_numbers<[1], [0], [0], [1], [0, 0, 1, 1], [], []>} : vector<8x128xf32>, vector<128x128xf32>, vector<8x128xf32> -> vector<8x128xf32>
    %cst_20 = arith.constant 9.99999974E-6 : f32
    %49 = vector.broadcast %cst_20 : f32 to vector<8x128xf32>
    %50 = arith.addf %48, %49 : vector<8x128xf32>
    %51 = math.rsqrt %50 : vector<8x128xf32>
    %52 = arith.mulf %45, %51 : vector<8x128xf32>
    %c0_21 = arith.constant 0 : index
    %c0_22 = arith.constant 0 : index
    %53 = vector.load %arg7[%c0_21, %c0_22] : memref<1x128xf32, #tpu.memory_space<vmem>>, vector<1x128xf32>
    %54 = vector.broadcast %53 : vector<1x128xf32> to vector<8x128xf32>
    %55 = arith.mulf %52, %54 : vector<8x128xf32>
    %c0_23 = arith.constant 0 : index
    %c0_24 = arith.constant 0 : index
    %56 = vector.load %arg8[%c0_23, %c0_24] : memref<1x128xf32, #tpu.memory_space<vmem>>, vector<1x128xf32>
    %57 = vector.broadcast %56 : vector<1x128xf32> to vector<8x128xf32>
    %58 = arith.addf %55, %57 : vector<8x128xf32>
    %c0_25 = arith.constant 0 : index
    %c0_26 = arith.constant 0 : index
    %59 = vector.load %arg9[%c0_25, %c0_26] : memref<8x128xf32, #tpu.memory_space<vmem>>, vector<8x128xf32>
    tpu.vector_store %arg9[%c0_25, %c0_26], %58 {strides = array<i32>} : memref<8x128xf32, #tpu.memory_space<vmem>>, vector<8x128xf32>,
    return
  }
  func.func @transform_0(%arg0: i32) -> (i32, i32) {
    %c0_i32 = arith.constant 0 : i32
    %c0_i32_0 = arith.constant 0 : i32
    return %arg0, %c0_i32 : i32, i32
  }
  func.func @transform_1(%arg0: i32) -> (i32, i32) {
    %c0_i32 = arith.constant 0 : i32
    %c0_i32_0 = arith.constant 0 : i32
    return %arg0, %c0_i32 : i32, i32
  }
  func.func @transform_2(%arg0: i32) -> (i32, i32) {
    %c0_i32 = arith.constant 0 : i32
    %c0_i32_0 = arith.constant 0 : i32
    %c0_i32_1 = arith.constant 0 : i32
    return %c0_i32, %c0_i32_0 : i32, i32
  }
  func.func @transform_3(%arg0: i32) -> (i32, i32) {
    %c0_i32 = arith.constant 0 : i32
    %c0_i32_0 = arith.constant 0 : i32
    %c0_i32_1 = arith.constant 0 : i32
    return %c0_i32, %c0_i32_0 : i32, i32
  }
  func.func @transform_4(%arg0: i32) -> (i32, i32) {
    %c0_i32 = arith.constant 0 : i32
    %c0_i32_0 = arith.constant 0 : i32
    %c0_i32_1 = arith.constant 0 : i32
    return %c0_i32, %c0_i32_0 : i32, i32
  }
  func.func @transform_5(%arg0: i32) -> (i32, i32) {
    %c0_i32 = arith.constant 0 : i32
    %c0_i32_0 = arith.constant 0 : i32
    %c0_i32_1 = arith.constant 0 : i32
    return %c0_i32, %c0_i32_0 : i32, i32
  }
  func.func @transform_6(%arg0: i32) -> (i32, i32) {
    %c0_i32 = arith.constant 0 : i32
    %c0_i32_0 = arith.constant 0 : i32
    %c0_i32_1 = arith.constant 0 : i32
    return %c0_i32, %c0_i32_0 : i32, i32
  }
  func.func @transform_7(%arg0: i32) -> (i32, i32) {
    %c0_i32 = arith.constant 0 : i32
    %c0_i32_0 = arith.constant 0 : i32
    %c0_i32_1 = arith.constant 0 : i32
    return %c0_i32, %c0_i32_0 : i32, i32
  }
  func.func @transform_8(%arg0: i32) -> (i32, i32) {
    %c0_i32 = arith.constant 0 : i32
    %c0_i32_0 = arith.constant 0 : i32
    return %arg0, %c0_i32 : i32, i32
  }
}

</mosaic_0001>

<llo_original>
// kernel: tpu_custom_call.1
$region0: #{tpu_custom_call.1}
  #allocation0 [shape = 'u32[]', space=smem, size = 0x4, offset = 0x4, fixed_abs, tag = 'smem constant byte address 0x4 - core index']
  #allocation1 [shape = 'u32[72,128]{1,0:T(1,128)}', space=vmem, size = 0x9000, scoped, tag = 'internal scratch']
  %s0 = inlined_call_operand.vmem [shape: f32[8,16], index: 0, kind: input, shape index: {}]
  %s1 = inlined_call_operand.vmem [shape: s32[8,4], index: 1, kind: input, shape index: {}]
  %s2 = inlined_call_operand.hbm [shape: f32[16,128], index: 2, kind: input, shape index: {}]
  %s3 = inlined_call_operand.hbm [shape: f32[40,128], index: 3, kind: input, shape index: {}]
  %s4 = inlined_call_operand.vmem [shape: f32[1,128], index: 4, kind: input, shape index: {}]
  %s5 = inlined_call_operand.hbm [shape: f32[128,128], index: 5, kind: input, shape index: {}]
  %s6 = inlined_call_operand.vmem [shape: f32[1,128], index: 6, kind: input, shape index: {}]
  %s7 = inlined_call_operand.vmem [shape: f32[1,128], index: 7, kind: input, shape index: {}]
  %s8 = inlined_call_operand.hbm [shape: f32[8,128], index: 8, kind: output, shape index: {}]
  %s9 = sld [smem:[#allocation0]]
  $region54: #{tpu_custom_call.1} parent=0
    _
  %s11 = ssub.s32 1, %s9
  %s12 = scalar_select 0, %s11, %s9
  $region1: #{tpu_custom_call.1} parent=0
    #allocation2 [shape = 'u8[8192]{0}', space=vmem, size = 0x2000, scoped, tag = 'input window, operand 2, single buffered']
    #allocation3 [shape = 's32[1]{0}', space=sflag, size = 0x4, scoped, tag = 'scoped memory for tpu_custom_call.1']
    #allocation4 [shape = 's32[1]{0}', space=sflag, size = 0x4, scoped, tag = 'scoped memory for tpu_custom_call.1']
    #allocation5 [shape = 'u8[20480]{0}', space=vmem, size = 0x5000, scoped, tag = 'input window, operand 3, single buffered']
    #allocation6 [shape = 's32[1]{0}', space=sflag, size = 0x4, scoped, tag = 'scoped memory for tpu_custom_call.1']
    #allocation7 [shape = 'u8[65536]{0}', space=vmem, size = 0x10000, scoped, tag = 'input window, operand 5, single buffered']
    #allocation8 [shape = 'u8[4096]{0}', space=vmem, size = 0x1000, scoped, tag = 'output window, operand 0, single buffered']
    %13 = vsyncpa [#allocation3], 0
    %14 = vsyncpa [#allocation6], 0
    %15 = vsyncpa [#allocation4], 0
    // Predicated region
    $region2: #{tpu_custom_call.1} parent=1 // pred_check
      _
    $region3: #{tpu_custom_call.1} parent=1 // pred_check_branch
      %17 = sbr.rel (0) target = $region5
    $region4: #{tpu_custom_call.1} parent=1 // pred_region
      _
    $region5: #{tpu_custom_call.1} parent=1 // pred_fallthru
      _
    // Predicated region
    $region6: #{tpu_custom_call.1} parent=1 // pred_check
      _
    $region7: #{tpu_custom_call.1} parent=1 // pred_check_branch
      %19 = sbr.rel (0) target = $region9
    $region8: #{tpu_custom_call.1} parent=1 // pred_region
      _
    $region9: #{tpu_custom_call.1} parent=1 // pred_fallthru
      _
    // Predicated region
    $region10: #{tpu_custom_call.1} parent=1 // pred_check
      _
    $region11: #{tpu_custom_call.1} parent=1 // pred_check_branch
      %21 = sbr.rel (0) target = $region13
    $region12: #{tpu_custom_call.1} parent=1 // pred_region
      %23 = vsyncadd [#allocation3], 0
      %s24 = sshll.u32 %s2, 4
      %s25 = int_to_ptr.hbm [resolvable:$true] %s24
      %s26 = sshll.u32 [#allocation2], 4
      %s27 = int_to_ptr.vmem [resolvable:$true] %s26
      %32 = dma.hbm_to_vmem [thread:$0]  %s25, 256, %s27, [#allocation3], 128, 128, 8
    $region13: #{tpu_custom_call.1} parent=1 // pred_fallthru
      _
    // Predicated region
    $region14: #{tpu_custom_call.1} parent=1 // pred_check
      _
    $region15: #{tpu_custom_call.1} parent=1 // pred_check_branch
      %34 = sbr.rel (0) target = $region17
    $region16: #{tpu_custom_call.1} parent=1 // pred_region
      %36 = vsyncadd [#allocation6], 0
      %s37 = sshll.u32 %s3, 4
      %s38 = int_to_ptr.hbm [resolvable:$true] %s37
      %s39 = sshll.u32 [#allocation5], 4
      %s40 = int_to_ptr.vmem [resolvable:$true] %s39
      %45 = dma.hbm_to_vmem [thread:$0]  %s38, 640, %s40, [#allocation6], 128, 128, 8
    $region17: #{tpu_custom_call.1} parent=1 // pred_fallthru
      _
    // Predicated region
    $region18: #{tpu_custom_call.1} parent=1 // pred_check
      _
    $region19: #{tpu_custom_call.1} parent=1 // pred_check_branch
      %47 = sbr.rel (0) target = $region21
    $region20: #{tpu_custom_call.1} parent=1 // pred_region
      _
    $region21: #{tpu_custom_call.1} parent=1 // pred_fallthru
      _
    // Predicated region
    $region22: #{tpu_custom_call.1} parent=1 // pred_check
      _
    $region23: #{tpu_custom_call.1} parent=1 // pred_check_branch
      %49 = sbr.rel (0) target = $region25
    $region24: #{tpu_custom_call.1} parent=1 // pred_region
      %51 = vsyncadd [#allocation6], 0
      %s52 = sshll.u32 %s5, 4
      %s53 = int_to_ptr.hbm [resolvable:$true] %s52
      %s54 = sshll.u32 [#allocation7], 4
      %s55 = int_to_ptr.vmem [resolvable:$true] %s54
      %60 = dma.hbm_to_vmem [thread:$0]  %s53, 2048, %s55, [#allocation6], 128, 128, 8
    $region25: #{tpu_custom_call.1} parent=1 // pred_fallthru
      _
    // Predicated region
    $region26: #{tpu_custom_call.1} parent=1 // pred_check
      _
    $region27: #{tpu_custom_call.1} parent=1 // pred_check_branch
      %62 = sbr.rel (0) target = $region29
    $region28: #{tpu_custom_call.1} parent=1 // pred_region
      _
    $region29: #{tpu_custom_call.1} parent=1 // pred_fallthru
      _
    // Predicated region
    $region30: #{tpu_custom_call.1} parent=1 // pred_check
      _
    $region31: #{tpu_custom_call.1} parent=1 // pred_check_branch
      %64 = sbr.rel (0) target = $region33
    $region32: #{tpu_custom_call.1} parent=1 // pred_region
      _
    $region33: #{tpu_custom_call.1} parent=1 // pred_fallthru
      _
    // Predicated region
    $region34: #{tpu_custom_call.1} parent=1 // pred_check
      _
    $region35: #{tpu_custom_call.1} parent=1 // pred_check_branch
      %66 = sbr.rel (0) target = $region37
    $region36: #{tpu_custom_call.1} parent=1 // pred_region
      %68 = dma.done [#allocation3], 256
    $region37: #{tpu_custom_call.1} parent=1 // pred_fallthru
      _
    // Predicated region
    $region38: #{tpu_custom_call.1} parent=1 // pred_check
      _
    $region39: #{tpu_custom_call.1} parent=1 // pred_check_branch
      %70 = sbr.rel (0) target = $region41
    $region40: #{tpu_custom_call.1} parent=1 // pred_region
      %72 = dma.done [#allocation6], 640
    $region41: #{tpu_custom_call.1} parent=1 // pred_fallthru
      _
    // Predicated region
    $region42: #{tpu_custom_call.1} parent=1 // pred_check
      _
    $region43: #{tpu_custom_call.1} parent=1 // pred_check_branch
      %74 = sbr.rel (0) target = $region45
    $region44: #{tpu_custom_call.1} parent=1 // pred_region
      %76 = dma.done [#allocation6], 2048
    $region45: #{tpu_custom_call.1} parent=1 // pred_fallthru
      _
    %v77 = vld [vmem:[%s0] sm:$0xff]
    %v78 = vld [vmem:[#allocation2] sm:$0xff]
    %v79 = vld [vmem:[#allocation2 + $0x8] sm:$0xff]
    %v80 = vlaneseq
    %v81 = vand.u32 %v80, 127
    %v82 = vld [vmem:[%s1] sm:$0xff]
    %83 = vset.pattern.permute.xlu0 0
    %84 = vperm.xlu0 %83, %v82
    %v85 = vpop.permute.xlu0 %84
    %vm86 = vcmp.eq.s32.totalorder %v81, %v85
    %v87 = vsel %vm86, 1, 0
    %v88 = vcvt.s32.f32 %v87
    %v89 = vadd.f32 %v88, 0.0
    %v90 = vadd.s32 %v82, 10
    %91 = vset.pattern.permute.xlu0 1
    %92 = vperm.xlu0 %91, %v90
    %v93 = vpop.permute.xlu0 %92
    %vm94 = vcmp.eq.s32.totalorder %v81, %v93
    %v95 = vsel %vm94, 1, 0
    %v96 = vcvt.s32.f32 %v95
    %v97 = vadd.f32 %v89, %v96
    %v98 = vadd.s32 %v82, 20
    %99 = vset.pattern.permute.xlu0 2
    %100 = vperm.xlu0 %99, %v98
    %v101 = vpop.permute.xlu0 %100
    %vm102 = vcmp.eq.s32.totalorder %v81, %v101
    %v103 = vsel %vm102, 1, 0
    %v104 = vcvt.s32.f32 %v103
    %v105 = vadd.f32 %v97, %v104
    %v106 = vadd.s32 %v82, 30
    %107 = vset.pattern.permute.xlu0 3
    %108 = vperm.xlu0 %107, %v106
    %v109 = vpop.permute.xlu0 %108
    %vm110 = vcmp.eq.s32.totalorder %v81, %v109
    %v111 = vsel %vm110, 1, 0
    %v112 = vcvt.s32.f32 %v111
    %v113 = vadd.f32 %v105, %v112
    %v114 = vld [vmem:[#allocation5] sm:$0xff]
    %v115 = vld [vmem:[#allocation5 + $0x8] sm:$0xff]
    %v116 = vld [vmem:[#allocation5 + $0x10] sm:$0xff]
    %v117 = vld [vmem:[#allocation5 + $0x18] sm:$0xff]
    %v118 = vld [vmem:[#allocation5 + $0x20] sm:$0xff]
    %vm119 = vcmask 326656
    %v121 = vsel %vm119, %v113, 0
    %123 = vmatpush.msra.mxu0 0.0
    %124 = vmatpush.msra.mxu0 0.0
    %125 = vmatpush.msra.mxu0 0.0
    %126 = vmatpush.msra.mxu0 0.0
    %127 = vmatpush.msra.mxu0 0.0
    %128 = vmatpush.msra.mxu0 0.0
    %129 = vmatpush.msra.mxu0 0.0
    %130 = vmatpush.msra.mxu0 0.0
    %131 = vmatpush.msra.mxu0 0.0
    %132 = vmatpush.msra.mxu0 0.0
    %133 = vmatpush.msra.mxu0 0.0
    %134 = vmatpush.msra.mxu0 %v118
    %135 = vmatpush.msra.mxu0 %v117
    %136 = vmatpush.msra.mxu0 %v116
    %137 = vmatpush.msra.mxu0 %v115
    %138 = vmatpush.msra.mxu0 %v114
    %139 = vmatmul.f32.gmra.mxu0 %v121
    %v140 = vpop.f32.mrf.mxu0
    %v141 = vadd.f32 0.0, %v140
    %142 = vdwg.mxu0
    %vm143 = vcmask 130048
    %v145 = vsel %vm143, %v77, 0
    %147 = vmatpush.msra.mxu0 0.0
    %148 = vmatpush.msra.mxu0 0.0
    %149 = vmatpush.msra.mxu0 0.0
    %150 = vmatpush.msra.mxu0 0.0
    %151 = vmatpush.msra.mxu0 0.0
    %152 = vmatpush.msra.mxu0 0.0
    %153 = vmatpush.msra.mxu0 0.0
    %154 = vmatpush.msra.mxu0 0.0
    %155 = vmatpush.msra.mxu0 0.0
    %156 = vmatpush.msra.mxu0 0.0
    %157 = vmatpush.msra.mxu0 0.0
    %158 = vmatpush.msra.mxu0 0.0
    %159 = vmatpush.msra.mxu0 0.0
    %160 = vmatpush.msra.mxu0 0.0
    %161 = vmatpush.msra.mxu0 %v79
    %162 = vmatpush.msra.mxu0 %v78
    %163 = vmatmul.f32.gmra.mxu0 %v145
    %v164 = vpop.f32.mrf.mxu0
    %v165 = vadd.f32 %v141, %v164
    %166 = vdwg.mxu0
    %v167 = vld [vmem:[%s4] sm:$0x1]
    %v169 = vperm.slane %v167, 0
    %v171 = vadd.f32 %v165, %v169
    %v172 = vld [vmem:[#allocation7] sm:$0xff]
    %v173 = vld [vmem:[#allocation7 + $0x8] sm:$0xff]
    %v174 = vld [vmem:[#allocation7 + $0x10] sm:$0xff]
    %v175 = vld [vmem:[#allocation7 + $0x18] sm:$0xff]
    %v176 = vld [vmem:[#allocation7 + $0x20] sm:$0xff]
    %v177 = vld [vmem:[#allocation7 + $0x28] sm:$0xff]
    %v178 = vld [vmem:[#allocation7 + $0x30] sm:$0xff]
    %v179 = vld [vmem:[#allocation7 + $0x38] sm:$0xff]
    %v180 = vld [vmem:[#allocation7 + $0x40] sm:$0xff]
    %v181 = vld [vmem:[#allocation7 + $0x48] sm:$0xff]
    %v182 = vld [vmem:[#allocation7 + $0x50] sm:$0xff]
    %v183 = vld [vmem:[#allocation7 + $0x58] sm:$0xff]
    %v184 = vld [vmem:[#allocation7 + $0x60] sm:$0xff]
    %v185 = vld [vmem:[#allocation7 + $0x68] sm:$0xff]
    %v186 = vld [vmem:[#allocation7 + $0x70] sm:$0xff]
    %v187 = vld [vmem:[#allocation7 + $0x78] sm:$0xff]
    %188 = vmatpush.msra.mxu0 %v187
    %189 = vmatpush.msra.mxu0 %v186
    %190 = vmatpush.msra.mxu0 %v185
    %191 = vmatpush.msra.mxu0 %v184
    %192 = vmatpush.msra.mxu0 %v183
    %193 = vmatpush.msra.mxu0 %v182
    %194 = vmatpush.msra.mxu0 %v181
    %195 = vmatpush.msra.mxu0 %v180
    %196 = vmatpush.msra.mxu0 %v179
    %197 = vmatpush.msra.mxu0 %v178
    %198 = vmatpush.msra.mxu0 %v177
    %199 = vmatpush.msra.mxu0 %v176
    %200 = vmatpush.msra.mxu0 %v175
    %201 = vmatpush.msra.mxu0 %v174
    %202 = vmatpush.msra.mxu0 %v173
    %203 = vmatpush.msra.mxu0 %v172
    %204 = vmatmul.f32.gmra.mxu0 %v171
    %v205 = vpop.f32.mrf.mxu0
    %v206 = vadd.f32 0.0, %v205
    %207 = vdwg.mxu0
    %v208 = vsub.f32 %v171, %v206
    %v209 = vmul.f32 %v208, %v208
    %210 = vmatpush.msra.mxu0 %v187
    %211 = vmatpush.msra.mxu0 %v186
    %212 = vmatpush.msra.mxu0 %v185
    %213 = vmatpush.msra.mxu0 %v184
    %214 = vmatpush.msra.mxu0 %v183
    %215 = vmatpush.msra.mxu0 %v182
    %216 = vmatpush.msra.mxu0 %v181
    %217 = vmatpush.msra.mxu0 %v180
    %218 = vmatpush.msra.mxu0 %v179
    %219 = vmatpush.msra.mxu0 %v178
    %220 = vmatpush.msra.mxu0 %v177
    %221 = vmatpush.msra.mxu0 %v176
    %222 = vmatpush.msra.mxu0 %v175
    %223 = vmatpush.msra.mxu0 %v174
    %224 = vmatpush.msra.mxu0 %v173
    %225 = vmatpush.msra.mxu0 %v172
    %226 = vmatmul.f32.gmra.mxu0 %v209
    %v227 = vpop.f32.mrf.mxu0
    %v228 = vadd.f32 1e-05, %v227
    %229 = vdwg.mxu0
    %v230 = vrsqrt.pop %v228
    %v231 = vmul.f32 %v230, %v228
    %v232 = vmul.f32 %v231, %v230
    %v233 = vmul.f32 0.5, %v232
    %v234 = vsub.f32 1.5, %v233
    %v235 = vmul.f32 %v230, %v234
    %vm236 = vweird.f32 %v228
    %vm237 = vweird.f32 %v230
    %vm238 = vmor %vm236, %vm237
    %v239 = vsel %vm238, %v230, %v235
    %v240 = vmul.f32 %v208, %v239
    %v241 = vld [vmem:[%s6] sm:$0x1]
    %v243 = vperm.slane %v241, 0
    %v245 = vmul.f32 %v240, %v243
    %v246 = vld [vmem:[%s7] sm:$0x1]
    %v248 = vperm.slane %v246, 0
    %v250 = vadd.f32 %v245, %v248
    %251 = vst [vmem:[#allocation8] sm:$0xff] %v250
    // Predicated region
    $region46: #{tpu_custom_call.1} parent=1 // pred_check
      _
    $region47: #{tpu_custom_call.1} parent=1 // pred_check_branch
      %253 = sbr.rel (0) target = $region49
    $region48: #{tpu_custom_call.1} parent=1 // pred_region
      %255 = vsyncadd [#allocation4], 0
      %s257 = sshll.u32 [#allocation8], 4
      %s258 = int_to_ptr.vmem [resolvable:$true] %s257
      %s259 = sshll.u32 %s8, 4
      %s260 = int_to_ptr.hbm [resolvable:$true] %s259
      %262 = dma.vmem_to_hbm [thread:$0]  %s258, 128, %s260, [#allocation4]
    $region49: #{tpu_custom_call.1} parent=1 // pred_fallthru
      _
    // Predicated region
    $region50: #{tpu_custom_call.1} parent=1 // pred_check
      _
    $region51: #{tpu_custom_call.1} parent=1 // pred_check_branch
      %264 = sbr.rel (0) target = $region53
    $region52: #{tpu_custom_call.1} parent=1 // pred_region
      %266 = dma.done [#allocation4], 128
    $region53: #{tpu_custom_call.1} parent=1 // pred_fallthru
      _
    %267 = vsyncpa [#allocation3], 1
    %268 = vsyncpa [#allocation6], 1
    %269 = vsyncpa [#allocation4], 1

</llo_original>
